<compile_context>
chip_gen: v7x
topology: tpu7x:2x2x1
jax: 0.10.0
libtpu: 0.0.40
codegen_flags: <defaults>
</compile_context>

<pallas_src>
import jax
import jax.numpy as jnp
from jax.experimental import pallas as pl
from jax.experimental.pallas import tpu as pltpu

_LANES = 128
_SUBLANES = 8
_FAST_PATH_ELEMS = 262_144      # <= 1 MiB f32: whole-slab VMEM-resident kernel
_MAX_TILE_ROWS = 4_096          # 4096 x 128 f32 tile = 2 MiB (safe on v5e/v6e/v7x)


def _round_up(a: int, b: int) -> int:
    return ((a + b - 1) // b) * b


# ---------------------------------------------------------------------------
# Fast path: whole array resident in VMEM, single fused kernel.
# ---------------------------------------------------------------------------
def _make_fused_kernel(n_valid: int, n_padded: int):
    n = float(n_valid)
    has_pad = n_padded != n_valid

    def kernel(x_ref, o_ref):
        x = x_ref[...].astype(jnp.float32)
        mean = jnp.sum(x) / n                       # zero padding is sum-neutral
        centered = x - mean
        if has_pad:
            rows = jax.lax.broadcasted_iota(jnp.int32, x.shape, 0)
            cols = jax.lax.broadcasted_iota(jnp.int32, x.shape, 1)
            valid = rows * x.shape[1] + cols < n_valid
            centered = jnp.where(valid, centered, 0.0)
        var = jnp.sum(centered * centered) / (n - 1.0)   # unbiased (torch.std)
        inv_std = jax.lax.rsqrt(var)
        o_ref[...] = (centered * inv_std).astype(o_ref.dtype)

    return kernel


# ---------------------------------------------------------------------------
# Large path, phase 1: streaming reduction + in-kernel finalize.
# ---------------------------------------------------------------------------
def _make_reduce_kernel(tile_rows: int, valid_rows: int, n_valid: int, ragged: bool):
    n = float(n_valid)

    def kernel(x_ref, stats_ref, sum_acc, sq_acc):
        i = pl.program_id(0)

        @pl.when(i == 0)
        def _init():
            sum_acc[...] = jnp.zeros_like(sum_acc)
            sq_acc[...] = jnp.zeros_like(sq_acc)

        x = x_ref[...].astype(jnp.float32)
        if ragged:  # mask garbage rows of the last (boundary) block
            row = jax.lax.broadcasted_iota(jnp.int32, x.shape, 0) + i * tile_rows
            x = jnp.where(row < valid_rows, x, 0.0)

        # Lane-dense partial accumulators: VPU adds per tile; the single
        # cross-lane reduction happens only in the finalize step below.
        sum_acc[...] += jnp.sum(x, axis=0, keepdims=True)
        sq_acc[...] += jnp.sum(x * x, axis=0, keepdims=True)

        @pl.when(i == pl.num_programs(0) - 1)
        def _finalize():
            s = jnp.sum(sum_acc[...])
            ss = jnp.sum(sq_acc[...])
            mean = s / n
            var = jnp.maximum((ss - n * mean * mean) / (n - 1.0), 0.0)
            inv_std = jax.lax.rsqrt(var)
            stats_ref[0:1, :] = jnp.full((1, _LANES), mean, jnp.float32)
            stats_ref[1:2, :] = jnp.full((1, _LANES), inv_std, jnp.float32)

    return kernel


# ---------------------------------------------------------------------------
# Large path, phase 2: tiled normalize with broadcast-row stats.
# ---------------------------------------------------------------------------
def _normalize_kernel(stats_ref, x_ref, o_ref):
    x = x_ref[...].astype(jnp.float32)
    mean = stats_ref[0:1, :]       # (1, 128), all lanes hold the same value
    inv_std = stats_ref[1:2, :]
    o_ref[...] = ((x - mean) * inv_std).astype(o_ref.dtype)


@jax.jit
def my_layer(x: jax.Array) -> jax.Array:
    """Pallas implementation of MyLayer.forward: (x - x.mean()) / x.std()."""
    orig_shape = x.shape
    total = x.size

    # Lane-dense (rows, 128) view.  For element counts that are a multiple of
    # 128 the reshape is free and there is no pad/slice at all.
    if total % _LANES == 0:
        rows = total // _LANES
        padded_total = total
        x2d = x.reshape(rows, _LANES)
    else:
        # TODO(synk): rare non-multiple-of-128 case keeps a minimal zero-pad +
        # final slice; zero padding is neutral for the sums and masked for the
        # centered variance.
        padded_total = _round_up(total, _SUBLANES * _LANES)
        rows = padded_total // _LANES
        x2d = jnp.pad(x.reshape(-1), (0, padded_total - total)).reshape(rows, _LANES)

    if padded_total <= _FAST_PATH_ELEMS:
        out2d = pl.pallas_call(
            _make_fused_kernel(total, padded_total),
            out_shape=jax.ShapeDtypeStruct((rows, _LANES), x.dtype),
            in_specs=[pl.BlockSpec(memory_space=pltpu.MemorySpace.VMEM)],
            out_specs=pl.BlockSpec(memory_space=pltpu.MemorySpace.VMEM),
        )(x2d)
    else:
        # Keep >= 2 tiles so the "parallel" normalize phase can shard across
        # both TensorCores on v7x; tiles stay <= 2 MiB so the double-buffered
        # in+out working set fits every generation's default scoped-VMEM limit.
        half = _round_up(-(-rows // 2), _SUBLANES)
        tile_rows = min(_MAX_TILE_ROWS, half)
        num_tiles = -(-rows // tile_rows)
        ragged = rows % tile_rows != 0

        stats = pl.pallas_call(
            _make_reduce_kernel(tile_rows, rows, total, ragged),
            out_shape=jax.ShapeDtypeStruct((2, _LANES), jnp.float32),
            grid=(num_tiles,),
            in_specs=[pl.BlockSpec((tile_rows, _LANES), lambda i: (i, 0))],
            out_specs=pl.BlockSpec((2, _LANES), lambda i: (0, 0)),
            scratch_shapes=[
                pltpu.VMEM((1, _LANES), jnp.float32),
                pltpu.VMEM((1, _LANES), jnp.float32),
            ],
            compiler_params=pltpu.CompilerParams(
                dimension_semantics=("arbitrary",),   # resident accumulators
            ),
        )(x2d)

        out2d = pl.pallas_call(
            _normalize_kernel,
            out_shape=jax.ShapeDtypeStruct((rows, _LANES), x.dtype),
            grid=(num_tiles,),
            in_specs=[
                pl.BlockSpec((2, _LANES), lambda i: (0, 0)),      # stats, resident
                pl.BlockSpec((tile_rows, _LANES), lambda i: (i, 0)),
            ],
            out_specs=pl.BlockSpec((tile_rows, _LANES), lambda i: (i, 0)),
            compiler_params=pltpu.CompilerParams(
                dimension_semantics=("parallel",),    # megacore on v7x
            ),
        )(stats, x2d)

    out = out2d.reshape(-1)
    if padded_total != total:
        out = out[:total]
    return out.reshape(orig_shape)


if __name__ == "__main__":
    key = jax.random.PRNGKey(0)
    # small NCHW input consistent with the module (original was (1, 1, 224, 224))
    x = jax.random.normal(key, (2, 4, 16, 16), dtype=jnp.float32)

    out = jax.block_until_ready(my_layer(x))

    # pure-JAX reference: unbiased std, like torch
    mean = jnp.mean(x)
    std = jnp.sqrt(jnp.sum((x - mean) ** 2) / (x.size - 1))
    ref = (x - mean) / std
    assert out.shape == x.shape and out.dtype == x.dtype
    assert jnp.allclose(out, ref, atol=1e-5, rtol=1e-5)

    print("KERNEL_OK")
</pallas_src>

<mosaic_0001>
module attributes {stable_mosaic.version = 11 : i64} {
  func.func @kernel(%arg0: memref<16x128xf32, #tpu.memory_space<vmem>>, %arg1: memref<16x128xf32, #tpu.memory_space<vmem>>) attributes {dimension_semantics = [], scalar_prefetch = 0 : i64, scratch_operands = 0 : i64, tpu.core_type = #tpu.core_type<tc>} {
    %c0 = arith.constant 0 : index
    %c0_0 = arith.constant 0 : index
    %0 = vector.load %arg0[%c0, %c0_0] : memref<16x128xf32, #tpu.memory_space<vmem>>, vector<16x128xf32>
    %1 = vector.shape_cast %0 : vector<16x128xf32> to vector<1x16x128xf32>
    %cst = arith.constant dense<0.000000e+00> : vector<1xf32>
    %2 = vector.multi_reduction <add>, %1, %cst [1, 2] : vector<1x16x128xf32> to vector<1xf32>
    %3 = vector.shape_cast %2 : vector<1xf32> to vector<1x1x1xf32>
    %4 = vector.extract %3[0, 0, 0] : f32 from vector<1x1x1xf32>
    %cst_1 = arith.constant 2.048000e+03 : f32
    %5 = arith.divf %4, %cst_1 : f32
    %6 = vector.broadcast %5 : f32 to vector<16x128xf32>
    %7 = arith.subf %0, %6 : vector<16x128xf32>
    %8 = arith.mulf %7, %7 : vector<16x128xf32>
    %9 = vector.shape_cast %8 : vector<16x128xf32> to vector<1x16x128xf32>
    %cst_2 = arith.constant dense<0.000000e+00> : vector<1xf32>
    %10 = vector.multi_reduction <add>, %9, %cst_2 [1, 2] : vector<1x16x128xf32> to vector<1xf32>
    %11 = vector.shape_cast %10 : vector<1xf32> to vector<1x1x1xf32>
    %12 = vector.extract %11[0, 0, 0] : f32 from vector<1x1x1xf32>
    %cst_3 = arith.constant 2.047000e+03 : f32
    %13 = arith.divf %12, %cst_3 : f32
    %14 = math.rsqrt %13 : f32
    %15 = vector.broadcast %14 : f32 to vector<16x128xf32>
    %16 = arith.mulf %7, %15 : vector<16x128xf32>
    %c0_4 = arith.constant 0 : index
    %c0_5 = arith.constant 0 : index
    %17 = vector.load %arg1[%c0_4, %c0_5] : memref<16x128xf32, #tpu.memory_space<vmem>>, vector<16x128xf32>
    tpu.vector_store %arg1[%c0_4, %c0_5], %16 {strides = array<i32>} : memref<16x128xf32, #tpu.memory_space<vmem>>, vector<16x128xf32>,
    return
  }
}

</mosaic_0001>

<llo_original>
// kernel: my_layer.1
$region0: #{my_layer.1}
  #allocation0 [shape = 'u32[]', space=smem, size = 0x4, offset = 0x4, fixed_abs, tag = 'smem constant byte address 0x4 - core index']
  #allocation1 [shape = 'u32[144,128]{1,0:T(1,128)}', space=vmem, size = 0x12000, scoped, tag = 'internal scratch']
  %s0 = inlined_call_operand.vmem [shape: f32[16,128], index: 0, kind: input, shape index: {}]
  %s1 = inlined_call_operand.vmem [shape: f32[16,128], index: 1, kind: output, shape index: {}]
  %s2 = sld [smem:[#allocation0]]
  $region14: #{my_layer.1} parent=0
    _
  %s4 = ssub.s32 1, %s2
  %s5 = scalar_select 0, %s4, %s2
  // Predicated region
  $region2: #{my_layer.1} parent=0 // pred_check
    _
  $region3: #{my_layer.1} parent=0 // pred_check_branch
    %7 = sbr.rel (0) target = $region5
  $region4: #{my_layer.1} parent=0 // pred_region
    _
  $region5: #{my_layer.1} parent=0 // pred_fallthru
    _
  %v8 = vld [vmem:[%s0] sm:$0xff]
  %v9 = vld [vmem:[%s0 + $0x8] sm:$0xff]
  %v10 = vadd.f32 %v8, %v9
  %11 = vadd.xlane.f32.xlu0 %v10
  %v12 = vpop.xlane.xlu0 %11
  %v13 = vrot.slane %v12, 4
  %v14 = vadd.f32 %v12, %v13
  %v15 = vrot.slane %v14, 2
  %v16 = vadd.f32 %v14, %v15
  %v17 = vrot.slane %v16, 1
  %v18 = vadd.f32 %v16, %v17
  %s19 = vtos %v18
  %v20 = vrcp.pop 2048.0
  %s21 = vtos %v20
  %s22 = smul.f32 %s19, %s21
  %v23 = vstv %s22
  %v24 = vsub.f32 %v8, %v23
  %v25 = vsub.f32 %v9, %v23
  %v26 = vmul.f32 %v24, %v24
  %v27 = vmul.f32 %v25, %v25
  %v28 = vadd.f32 %v26, %v27
  %29 = vadd.xlane.f32.xlu0 %v28
  %v30 = vpop.xlane.xlu0 %29
  %v31 = vrot.slane %v30, 4
  %v32 = vadd.f32 %v30, %v31
  %v33 = vrot.slane %v32, 2
  %v34 = vadd.f32 %v32, %v33
  %v35 = vrot.slane %v34, 1
  %v36 = vadd.f32 %v34, %v35
  %s37 = vtos %v36
  %v38 = vrcp.pop 2047.0
  %s39 = vtos %v38
  %s40 = smul.f32 %s37, %s39
  %v41 = vstv %s40
  %v42 = vrsqrt.pop %v41
  %s43 = vtos %v42
  %v44 = vstv %s43
  %v45 = vmul.f32 %v24, %v44
  %v46 = vmul.f32 %v25, %v44
  %47 = vst [vmem:[%s1] sm:$0xff] %v45
  %48 = vst [vmem:[%s1 + $0x8] sm:$0xff] %v46
  // Predicated region
  $region6: #{my_layer.1} parent=0 // pred_check
    _
  $region7: #{my_layer.1} parent=0 // pred_check_branch
    %50 = sbr.rel (0) target = $region9
  $region8: #{my_layer.1} parent=0 // pred_region
    _
  $region9: #{my_layer.1} parent=0 // pred_fallthru
    _
  // Predicated region
  $region10: #{my_layer.1} parent=0 // pred_check
    _
  $region11: #{my_layer.1} parent=0 // pred_check_branch
    %52 = sbr.rel (0) target = $region13
  $region12: #{my_layer.1} parent=0 // pred_region
    _
  $region13: #{my_layer.1} parent=0 // pred_fallthru
    _

</llo_original>
